<compile_context>
chip_gen: v7x
topology: tpu7x:2x2x1
jax: 0.10.0
libtpu: 0.0.40
codegen_flags: <defaults>
</compile_context>

<pallas_src>
import jax
import jax.numpy as jnp
from jax.experimental import pallas as pl
from jax.experimental.pallas import tpu as pltpu

_LANE = 128
_MAX_COLS = 32 * _LANE           # widest slab considered: 4096 lanes
_TARGET_BLOCK_BYTES = 4 << 20    # ~4 MiB per block; x4 with double-buffered in+out
_VMEM_LIMIT_BYTES = 32 << 20     # safe on v5e/v6e/v7x


def _identity_kernel(x_ref, o_ref):
    # Pure pass-through: copy the current VMEM tile of the input to the output.
    o_ref[...] = x_ref[...]


def _sublane_multiple(dtype):
    # f32 -> 8, bf16/f16 -> 16, int8/fp8 -> 32 (sub-32-bit dtypes pack along sublanes).
    itemsize = jnp.dtype(dtype).itemsize
    return max(8, 32 // max(1, itemsize))


def _choose_cols(n):
    # Widest multiple of 128 (<= 4096) that divides n exactly; None if n % 128 != 0.
    if n % _LANE != 0:
        return None
    max_k = min(_MAX_COLS // _LANE, n // _LANE)
    for k in range(max_k, 0, -1):
        cols = k * _LANE
        if n % cols == 0:
            return cols
    return None


def _choose_tile_rows(rows, row_bytes, sub):
    tr = max(1, _TARGET_BLOCK_BYTES // row_bytes)
    if tr >= rows:
        return int(rows)                    # single block == full dim (always legal)
    tr = max(sub, (tr // sub) * sub)        # multiple of the dtype's sublane quantum
    return int(min(tr, rows))


def _copy_2d(x2d, tile_rows):
    rows, cols = x2d.shape
    nbytes = x2d.size * jnp.dtype(x2d.dtype).itemsize
    return pl.pallas_call(
        _identity_kernel,
        out_shape=jax.ShapeDtypeStruct((rows, cols), x2d.dtype),
        grid_spec=pltpu.PrefetchScalarGridSpec(
            num_scalar_prefetch=0,
            grid=(pl.cdiv(rows, tile_rows),),          # partial last block handled by Pallas
            in_specs=[pl.BlockSpec((tile_rows, cols), lambda i: (i, 0))],
            out_specs=pl.BlockSpec((tile_rows, cols), lambda i: (i, 0)),
        ),
        compiler_params=pltpu.CompilerParams(
            dimension_semantics=("parallel",),
            vmem_limit_bytes=_VMEM_LIMIT_BYTES,
        ),
        cost_estimate=pl.CostEstimate(
            flops=0, transcendentals=0, bytes_accessed=2 * nbytes),
    )(x2d)


def identity_pallas(x, copy=True):
    """Identity forward pass.

    copy=False returns x itself (exact PyTorch `return x` semantics, zero cost).
    copy=True (default) materializes an equal fresh array via the Pallas copy kernel.
    """
    if not copy:
        return x

    n = x.size
    if n == 0:
        return x

    dtype = x.dtype
    sub = _sublane_multiple(dtype)
    itemsize = jnp.dtype(dtype).itemsize

    cols = _choose_cols(n)
    if cols is not None:
        # Fast path: pure metadata reshape -> wide lane-dense slab, no padding.
        rows = n // cols
        x2d = x.reshape(rows, cols)
        tile_rows = _choose_tile_rows(rows, cols * itemsize, sub)
        out2d = _copy_2d(x2d, tile_rows)
        return out2d.reshape(x.shape)

    # Fallback for element counts not divisible by 128: pad to a lane-dense slab,
    # copy, slice back. (Rare for CNN feature maps.)
    cols = _LANE
    rows = pl.cdiv(n, cols)
    rows_padded = pl.cdiv(rows, sub) * sub
    flat = jnp.pad(x.reshape(-1), (0, rows_padded * cols - n))
    x2d = flat.reshape(rows_padded, cols)
    tile_rows = _choose_tile_rows(rows_padded, cols * itemsize, sub)
    out2d = _copy_2d(x2d, tile_rows)
    return out2d.reshape(-1)[:n].reshape(x.shape)


if __name__ == "__main__":
    key = jax.random.PRNGKey(0)
    # Small NCHW feature map (batch=2, channels=4, spatial=16x16) -> fast path.
    x = jax.random.normal(key, (2, 4, 16, 16), dtype=jnp.float32)

    y = identity_pallas(x)
    jax.block_until_ready(y)
    assert y.shape == x.shape
    assert y.dtype == x.dtype
    assert bool(jnp.array_equal(y, x))

    # Also exercise the ragged fallback path (element count not a multiple of 128).
    x_odd = jax.random.normal(jax.random.PRNGKey(0), (3, 5, 7), dtype=jnp.float32)
    y_odd = identity_pallas(x_odd)
    jax.block_until_ready(y_odd)
    assert y_odd.shape == x_odd.shape
    assert bool(jnp.array_equal(y_odd, x_odd))

    print("KERNEL_OK")
</pallas_src>

<mosaic_0001>
module attributes {stable_mosaic.version = 11 : i64} {
  func.func @_identity_kernel(%arg0: i32, %arg1: memref<1x2048xf32, #tpu.memory_space<vmem>>, %arg2: memref<1x2048xf32, #tpu.memory_space<vmem>>) attributes {dimension_semantics = [#tpu.dimension_semantics<parallel>], iteration_bounds = array<i64: 1>, scalar_prefetch = 0 : i64, scratch_operands = 0 : i64, tpu.core_type = #tpu.core_type<tc>, window_params = [{transform_indices = @transform_0, window_bounds = array<i64: 1, 2048>}, {transform_indices = @transform_1, window_bounds = array<i64: 1, 2048>}]} {
    %c0 = arith.constant 0 : index
    %c0_0 = arith.constant 0 : index
    %0 = vector.load %arg1[%c0, %c0_0] : memref<1x2048xf32, #tpu.memory_space<vmem>>, vector<1x2048xf32>
    %c0_1 = arith.constant 0 : index
    %c0_2 = arith.constant 0 : index
    %1 = vector.load %arg2[%c0_1, %c0_2] : memref<1x2048xf32, #tpu.memory_space<vmem>>, vector<1x2048xf32>
    tpu.vector_store %arg2[%c0_1, %c0_2], %0 {strides = array<i32>} : memref<1x2048xf32, #tpu.memory_space<vmem>>, vector<1x2048xf32>,
    return
  }
  func.func @transform_0(%arg0: i32) -> (i32, i32) {
    %c0_i32 = arith.constant 0 : i32
    %c0_i32_0 = arith.constant 0 : i32
    return %arg0, %c0_i32 : i32, i32
  }
  func.func @transform_1(%arg0: i32) -> (i32, i32) {
    %c0_i32 = arith.constant 0 : i32
    %c0_i32_0 = arith.constant 0 : i32
    return %arg0, %c0_i32 : i32, i32
  }
}

</mosaic_0001>

<llo_original>
// kernel: tpu_custom_call.1
$region0: #{tpu_custom_call.1}
  #allocation0 [shape = 'u32[]', space=smem, size = 0x4, offset = 0x4, fixed_abs, tag = 'smem constant byte address 0x4 - core index']
  #allocation1 [shape = 'u32[144,128]{1,0:T(1,128)}', space=vmem, size = 0x12000, scoped, tag = 'internal scratch']
  %s0 = inlined_call_operand.hbm [shape: f32[1,2048], index: 0, kind: input, shape index: {}]
  %s1 = inlined_call_operand.hbm [shape: f32[1,2048], index: 1, kind: output, shape index: {}]
  %s2 = sld [smem:[#allocation0]]
  $region18: #{tpu_custom_call.1} parent=0
    _
  %s4 = ssub.s32 1, %s2
  %s5 = scalar_select 0, %s4, %s2
  $region1: #{tpu_custom_call.1} parent=0
    #allocation2 [shape = 'u8[8192]{0}', space=vmem, size = 0x2000, scoped, tag = 'input window, operand 0, single buffered']
    #allocation3 [shape = 's32[1]{0}', space=sflag, size = 0x4, scoped, tag = 'scoped memory for tpu_custom_call.1']
    #allocation4 [shape = 's32[1]{0}', space=sflag, size = 0x4, scoped, tag = 'scoped memory for tpu_custom_call.1']
    #allocation5 [shape = 'u8[8192]{0}', space=vmem, size = 0x2000, scoped, tag = 'output window, operand 0, single buffered']
    %6 = vsyncpa [#allocation3], 0
    %7 = vsyncpa [#allocation4], 0
    // Predicated region
    $region2: #{tpu_custom_call.1} parent=1 // pred_check
      _
    $region3: #{tpu_custom_call.1} parent=1 // pred_check_branch
      %9 = sbr.rel (0) target = $region5
    $region4: #{tpu_custom_call.1} parent=1 // pred_region
      %s11 = ssub.s32 256, 256
      %12 = vsyncadd [#allocation3], %s11
      %s14 = sshll.u32 [#allocation2], 4
      %s15 = int_to_ptr.vmem [resolvable:$true] %s14
      %17 = dma.hbm_to_vmem [thread:$0]  %s0, 256, %s15, [#allocation3]
    $region5: #{tpu_custom_call.1} parent=1 // pred_fallthru
      _
    // Predicated region
    $region6: #{tpu_custom_call.1} parent=1 // pred_check
      _
    $region7: #{tpu_custom_call.1} parent=1 // pred_check_branch
      %19 = sbr.rel (0) target = $region9
    $region8: #{tpu_custom_call.1} parent=1 // pred_region
      %20 = dma.done [#allocation3], 256
    $region9: #{tpu_custom_call.1} parent=1 // pred_fallthru
      _
    %v21 = vld [vmem:[#allocation2] sm:$0xff]
    %v22 = vld [vmem:[#allocation2 + $0x8] sm:$0xff]
    %23 = vst [vmem:[#allocation5] sm:$0xff] %v21
    %24 = vst [vmem:[#allocation5 + $0x8] sm:$0xff] %v22
    // Predicated region
    $region10: #{tpu_custom_call.1} parent=1 // pred_check
      _
    $region11: #{tpu_custom_call.1} parent=1 // pred_check_branch
      %26 = sbr.rel (0) target = $region13
    $region12: #{tpu_custom_call.1} parent=1 // pred_region
      %s28 = ssub.s32 256, 256
      %29 = vsyncadd [#allocation4], %s28
      %s31 = sshll.u32 [#allocation5], 4
      %s32 = int_to_ptr.vmem [resolvable:$true] %s31
      %34 = dma.vmem_to_hbm [thread:$0]  %s32, 256, %s1, [#allocation4]
    $region13: #{tpu_custom_call.1} parent=1 // pred_fallthru
      _
    // Predicated region
    $region14: #{tpu_custom_call.1} parent=1 // pred_check
      _
    $region15: #{tpu_custom_call.1} parent=1 // pred_check_branch
      %36 = sbr.rel (0) target = $region17
    $region16: #{tpu_custom_call.1} parent=1 // pred_region
      %37 = dma.done [#allocation4], 256
    $region17: #{tpu_custom_call.1} parent=1 // pred_fallthru
      _
    %38 = vsyncpa [#allocation3], 1
    %39 = vsyncpa [#allocation4], 1

</llo_original>
